<compile_context>
chip_gen: v7x
topology: tpu7x:2x2x1
jax: 0.10.0
libtpu: 0.0.40
codegen_flags: <defaults>
</compile_context>

<pallas_src>
import jax
import jax.numpy as jnp
from jax import lax
from jax.experimental import pallas as pl
from jax.experimental.pallas import tpu as pltpu


def _gemm_bias_relu_kernel(p_ref, w_ref, b_ref, o_ref):
    # p_ref: (tm, 9*Cin)    bf16 im2col patch rows for this grid step
    # w_ref: (9*Cin, NCOL)  bf16 merged per-phase weight (zero-padded columns)
    # b_ref: (1, NCOL)      f32 bias tiled over the 4 output phases
    # o_ref: (tm, NCOL)     f32 output rows, columns ordered (ph, pw, co)
    acc = jnp.dot(p_ref[...], w_ref[...], preferred_element_type=jnp.float32)
    acc = jnp.maximum(acc + b_ref[...], 0.0)          # bias + ReLU in f32
    o_ref[...] = acc.astype(o_ref.dtype)


def _pick_row_block(m):
    """Rows of the patch matrix per grid step.

    Multiple of 8 (sublane-aligned), divides M exactly (no ragged blocks),
    targets ~512 rows/step, and keeps >= 2 steps whenever the shape allows so
    dimension_semantics=("parallel",) can shard across v7x's two TensorCores.
    """
    divisors = [d for d in range(8, m + 1, 8) if m % d == 0]
    if not divisors:
        return m                                   # tiny / odd M: one full block
    preferred = [d for d in divisors if d <= 512 and m // d >= 2]
    if preferred:
        return max(preferred)
    capped = [d for d in divisors if d <= 512]
    return max(capped) if capped else min(divisors)


def decoder_forward(x_nchw, weight, bias):
    """ConvTranspose2d(hidden, out, kernel_size=4, stride=2, padding=1) + ReLU.

    x_nchw: (N, Cin, H, W)      PyTorch NCHW input
    weight: (Cin, Cout, 4, 4)   PyTorch ConvTranspose2d weight layout
    bias:   (Cout,)
    returns (N, Cout, 2H, 2W)   NCHW, matching the PyTorch module.
    """
    N, Cin, H, W = x_nchw.shape
    Cout = weight.shape[1]
    OH, OW = 2 * H, 2 * W
    K = 9 * Cin                      # contraction: 3x3 neighbourhood x Cin
    C4 = 4 * Cout                    # 4 output phases x Cout
    NCOL = max(C4, 128)              # lane-dense stores when Cout is small
    M = N * H * W

    # ---- wrapper-side im2col (tiny XLA glue; kernel stays a pure GEMM) ------
    xp = jnp.pad(jnp.transpose(x_nchw, (0, 2, 3, 1)),
                 ((0, 0), (1, 1), (1, 1), (0, 0)))            # (N, H+2, W+2, Cin)
    taps = [xp[:, dh:dh + H, dw:dw + W, :]
            for dh in range(3) for dw in range(3)]
    patches = jnp.concatenate(taps, axis=-1)                   # (N, H, W, 9*Cin)
    patches = patches.reshape(M, K).astype(jnp.bfloat16)       # lane-dense rows

    # ---- merged per-phase weight -------------------------------------------
    # y[n, 2i+ph, 2j+pw, co] =
    #   sum_{dh,dw,ci} xpad[n, i+dh, j+dw, ci] * w[ci, co, 3+ph-2*dh, 3+pw-2*dw]
    # with valid taps (dh - ph) in {0,1} and (dw - pw) in {0,1}.
    # W_all[(dh*3+dw)*Cin + ci, (ph*2+pw)*Cout + co]
    blocks = []
    for dh in range(3):
        for dw in range(3):
            cols = []
            for ph in range(2):
                for pw in range(2):
                    if (dh - ph) in (0, 1) and (dw - pw) in (0, 1):
                        kh, kw = 3 + ph - 2 * dh, 3 + pw - 2 * dw
                        cols.append(weight[:, :, kh, kw])              # (Cin, Cout)
                    else:
                        cols.append(jnp.zeros((Cin, Cout), weight.dtype))
            blocks.append(jnp.concatenate(cols, axis=1))               # (Cin, 4*Cout)
    w_all = jnp.concatenate(blocks, axis=0)                            # (9*Cin, 4*Cout)
    b_all = jnp.tile(bias, 4).reshape(1, C4).astype(jnp.float32)
    if NCOL > C4:                                 # pad columns to >=128 lanes
        w_all = jnp.concatenate(
            [w_all, jnp.zeros((K, NCOL - C4), w_all.dtype)], axis=1)
        b_all = jnp.concatenate(
            [b_all, jnp.zeros((1, NCOL - C4), b_all.dtype)], axis=1)
    w_all = w_all.astype(jnp.bfloat16)

    # ---- grid over GEMM rows -------------------------------------------------
    tm = _pick_row_block(M)
    grid = (M // tm,)

    out2d = pl.pallas_call(
        _gemm_bias_relu_kernel,
        out_shape=jax.ShapeDtypeStruct((M, NCOL), x_nchw.dtype),
        grid=grid,
        in_specs=[
            # default double-buffering; sweep pl.Buffered(3) on v5e if DMA-bound
            pl.BlockSpec((tm, K), lambda g: (g, 0)),
            pl.BlockSpec((K, NCOL), lambda g: (0, 0)),
            pl.BlockSpec((1, NCOL), lambda g: (0, 0)),
        ],
        out_specs=pl.BlockSpec((tm, NCOL), lambda g: (g, 0)),
        compiler_params=pltpu.CompilerParams(
            dimension_semantics=("parallel",),
            vmem_limit_bytes=32 * 1024 * 1024),
    )(patches, w_all, b_all)

    # ---- de-interleave phases, back to NCHW to match the PyTorch module ------
    out = out2d[:, :C4].reshape(N, H, W, 2, 2, Cout)   # (n, i, j, ph, pw, co)
    out = jnp.transpose(out, (0, 5, 1, 3, 2, 4))       # (n, co, i, ph, j, pw)
    return out.reshape(N, Cout, OH, OW)


def decoder_reference(x, weight, bias):
    """Pure-JAX reference: transposed conv via lhs-dilated conv (f32)."""
    w = jnp.transpose(weight, (1, 0, 2, 3))[:, :, ::-1, ::-1]   # (Cout, Cin, 4, 4)
    y = lax.conv_general_dilated(
        x, w, window_strides=(1, 1), padding=((2, 2), (2, 2)),
        lhs_dilation=(2, 2), rhs_dilation=(1, 1),
        dimension_numbers=("NCHW", "OIHW", "NCHW"))
    y = y + bias.reshape(1, -1, 1, 1)
    return jnp.maximum(y, 0.0)


if __name__ == "__main__":
    # small shapes consistent with the module (hidden_channels=8, output_channels=4)
    N, Cin, Cout, H, W = 2, 8, 4, 16, 16

    key = jax.random.PRNGKey(0)
    kx, kw, kb = jax.random.split(key, 3)

    x = jax.random.normal(kx, (N, Cin, H, W), dtype=jnp.float32)
    # PyTorch ConvTranspose2d weight shape: (in_channels, out_channels, kH, kW)
    fan = Cin * 4 * 4
    weight = jax.random.uniform(kw, (Cin, Cout, 4, 4), dtype=jnp.float32,
                                minval=-1.0, maxval=1.0) / jnp.sqrt(fan)
    bias = jax.random.uniform(kb, (Cout,), dtype=jnp.float32,
                              minval=-1.0, maxval=1.0) / jnp.sqrt(fan)

    decoder_jit = jax.jit(decoder_forward)
    out = jax.block_until_ready(decoder_jit(x, weight, bias))
    ref = jax.block_until_ready(decoder_reference(x, weight, bias))

    assert out.shape == (N, Cout, 2 * H, 2 * W), out.shape
    # bf16 MXU inputs with f32 accumulation -> loosened tolerance vs f32 reference
    max_err = float(jnp.max(jnp.abs(out - ref)))
    assert jnp.allclose(out, ref, atol=2e-2, rtol=2e-2), max_err

    print("KERNEL_OK")
</pallas_src>

<mosaic_0001>
module attributes {stable_mosaic.version = 11 : i64} {
  func.func @_gemm_bias_relu_kernel(%arg0: i32, %arg1: memref<256x72xbf16, #tpu.memory_space<vmem>>, %arg2: memref<72x128xbf16, #tpu.memory_space<vmem>>, %arg3: memref<1x128xf32, #tpu.memory_space<vmem>>, %arg4: memref<256x128xf32, #tpu.memory_space<vmem>>) attributes {dimension_semantics = [#tpu.dimension_semantics<parallel>], iteration_bounds = array<i64: 2>, scalar_prefetch = 0 : i64, scratch_operands = 0 : i64, tpu.core_type = #tpu.core_type<tc>, window_params = [{transform_indices = @transform_0, window_bounds = array<i64: 256, 72>}, {pipeline_mode = #tpu.pipeline_mode<synchronous>, transform_indices = @transform_1, window_bounds = array<i64: 72, 128>}, {pipeline_mode = #tpu.pipeline_mode<synchronous>, transform_indices = @transform_2, window_bounds = array<i64: 1, 128>}, {transform_indices = @transform_3, window_bounds = array<i64: 256, 128>}]} {
    %c0 = arith.constant 0 : index
    %c0_0 = arith.constant 0 : index
    %0 = vector.load %arg1[%c0, %c0_0] : memref<256x72xbf16, #tpu.memory_space<vmem>>, vector<256x72xbf16>
    %c0_1 = arith.constant 0 : index
    %c0_2 = arith.constant 0 : index
    %1 = vector.load %arg2[%c0_1, %c0_2] : memref<72x128xbf16, #tpu.memory_space<vmem>>, vector<72x128xbf16>
    %cst = arith.constant dense<0.000000e+00> : vector<256x128xf32>
    %2 = tpu.matmul %0, %1, %cst {dimension_numbers = #tpu.dot_dimension_numbers<[1], [0], [0], [1], [0, 0, 1, 1], [], []>} : vector<256x72xbf16>, vector<72x128xbf16>, vector<256x128xf32> -> vector<256x128xf32>
    %c0_3 = arith.constant 0 : index
    %c0_4 = arith.constant 0 : index
    %3 = vector.load %arg3[%c0_3, %c0_4] : memref<1x128xf32, #tpu.memory_space<vmem>>, vector<1x128xf32>
    %4 = vector.broadcast %3 : vector<1x128xf32> to vector<256x128xf32>
    %5 = arith.addf %2, %4 : vector<256x128xf32>
    %cst_5 = arith.constant 0.000000e+00 : f32
    %6 = vector.broadcast %cst_5 : f32 to vector<256x128xf32>
    %7 = arith.maximumf %5, %6 : vector<256x128xf32>
    %c0_6 = arith.constant 0 : index
    %c0_7 = arith.constant 0 : index
    %8 = vector.load %arg4[%c0_6, %c0_7] : memref<256x128xf32, #tpu.memory_space<vmem>>, vector<256x128xf32>
    tpu.vector_store %arg4[%c0_6, %c0_7], %7 {strides = array<i32>} : memref<256x128xf32, #tpu.memory_space<vmem>>, vector<256x128xf32>,
    return
  }
  func.func @transform_0(%arg0: i32) -> (i32, i32) {
    %c0_i32 = arith.constant 0 : i32
    %c0_i32_0 = arith.constant 0 : i32
    return %arg0, %c0_i32 : i32, i32
  }
  func.func @transform_1(%arg0: i32) -> (i32, i32) {
    %c0_i32 = arith.constant 0 : i32
    %c0_i32_0 = arith.constant 0 : i32
    %c0_i32_1 = arith.constant 0 : i32
    return %c0_i32, %c0_i32_0 : i32, i32
  }
  func.func @transform_2(%arg0: i32) -> (i32, i32) {
    %c0_i32 = arith.constant 0 : i32
    %c0_i32_0 = arith.constant 0 : i32
    %c0_i32_1 = arith.constant 0 : i32
    return %c0_i32, %c0_i32_0 : i32, i32
  }
  func.func @transform_3(%arg0: i32) -> (i32, i32) {
    %c0_i32 = arith.constant 0 : i32
    %c0_i32_0 = arith.constant 0 : i32
    return %arg0, %c0_i32 : i32, i32
  }
}

</mosaic_0001>

<llo_original>
// kernel: tile.8
$region0: #{tile.8}
  #allocation0 [shape = 's32[1]{0}', space=sflag, size = 0x4, scoped, tag = 'scoped memory for tile.8']
  %s0 = inlined_call_operand.vmem [shape: f32[4], index: 0, kind: input, shape index: {}]
  %s1 = inlined_call_operand.vmem [shape: f32[4,4], index: 1, kind: output, shape index: {}]
  // Predicated region
  $region2: #{tile.8} parent=0 // pred_check
    _
  $region3: #{tile.8} parent=0 // pred_check_branch
    %3 = sbr.rel (0) target = $region5
  $region4: #{tile.8} parent=0 // pred_region
    _
  $region5: #{tile.8} parent=0 // pred_fallthru
    _
  %v4 = vld [vmem:[%s0] ss:$0 sm:$0xff]
  %5 = vst [vmem:[%s1] sm:$0xf] %v4

// kernel: tile.9
$region0: #{tile.9}
  %s0 = inlined_call_operand.vmem [shape: f32[4,4], index: 0, kind: input, shape index: {}]
  %s1 = inlined_call_operand.vmem [shape: f32[1,16], index: 1, kind: output, shape index: {}]
  $region1: #{tile.9} parent=0
    #allocation0 [shape = 'u8[4096]{0}', space=vmem, size = 0x1000, scoped, tag = 'scoped mem for output reshape']
    #allocation1 [shape = 'u8[4096]{0}', space=vmem, size = 0x1000, scoped, tag = 'scoped mem for input reshape']
    %s3 = sshllo.u32 0, 4
    %v4 = vld [vmem:[%s0] sm:%s3]
    %5 = vst [vmem:[#allocation1] sm:%s3] %v4
    %v6 = vld [vmem:[#allocation1] sm:$0x1]
    %vm7 = vcmask 31744
    %8 = vst.msk [vmem:[#allocation0] sm:$0x1] %vm7, %v6
    %s9 = scalar_lea.vmem [#allocation1], 3
    %v10 = vld [vmem:[%s9] sm:$0x1]
    %11 = vrot.lane.b32.xlu0 %v10, 12
    %v12 = vpop.permute.xlu0 %11
    %vm13 = vcmask 130144
    %14 = vst.msk [vmem:[#allocation0] sm:$0x1] %vm13, %v12
    %s15 = scalar_lea.vmem [#allocation1], 2
    %v16 = vld [vmem:[%s15] sm:$0x1]
    %17 = vrot.lane.b32.xlu0 %v16, 8
    %v18 = vpop.permute.xlu0 %17
    %vm19 = vcmask 97344
    %20 = vst.msk [vmem:[#allocation0] sm:$0x1] %vm19, %v18
    %s21 = scalar_lea.vmem [#allocation1], 1
    %v22 = vld [vmem:[%s21] sm:$0x1]
    %23 = vrot.lane.b32.xlu0 %v22, 4
    %v24 = vpop.permute.xlu0 %23
    %vm25 = vcmask 64544
    %26 = vst.msk [vmem:[#allocation0] sm:$0x1] %vm25, %v24
    %s28 = sshllo.u32 0, 1
    %v30 = vld [vmem:[#allocation0] sm:%s28]
    %s31 = sshllo.u32 0, 1
    %32 = vst [vmem:[%s1] sm:%s31] %v30

// kernel: decoder_forward.1
$region0: #{decoder_forward.1}
  #allocation0 [shape = 'u32[]', space=smem, size = 0x4, offset = 0x4, fixed_abs, tag = 'smem constant byte address 0x4 - core index']
  #allocation1 [shape = 'u32[144,128]{1,0:T(1,128)}', space=vmem, size = 0x12000, scoped, tag = 'internal scratch']
  %s0 = inlined_call_operand.vmem [shape: bf16[512,72], index: 0, kind: input, shape index: {}]
  %s1 = inlined_call_operand.vmem [shape: bf16[72,128], index: 1, kind: input, shape index: {}]
  %s2 = inlined_call_operand.vmem [shape: f32[1,128], index: 2, kind: input, shape index: {}]
  %s3 = inlined_call_operand.vmem [shape: f32[512,128], index: 3, kind: output, shape index: {}]
  %s4 = sld [smem:[#allocation0]]
  $region45: #{decoder_forward.1} parent=0
    _
  %s6 = ssub.s32 1, %s4
  %s7 = scalar_select 0, %s6, %s4
  loop: start=0, step=1, limit=4
  $region2: #{decoder_forward.1} parent=0 // loop_pre_header
    _
  $region3: #{decoder_forward.1} parent=0 // loop_header
    %s9 = sphi 0, %s13
    %p10 = scmp.ge.s32.totalorder %s9, 4
    %s19 = sphi 0, %s21
    %s22 = sphi 0, %s19
    %s23 = sphi 0, %s22
    %s39 = sphi 0, %s23
    %s43 = sphi 0, %s43
    %s45 = sphi 0, %s43
    %s46 = sphi 0, %s45
    %s60 = sphi 0, %s46
    %s64 = sphi 0, %s64
    %s66 = sphi 0, %s64
    %s67 = sphi 0, %s66
    %s81 = sphi 0, %s67
    %s87 = sphi 0, %s89
    %s90 = sphi 0, %s87
    %s91 = sphi 0, %s90
    %s107 = sphi 0, %s91
  $region4: #{decoder_forward.1} parent=0 // loop_header_branch
    %12 = sbr.rel (%p10) target = $region8
  $region5: #{decoder_forward.1} parent=0 // loop_body
    %s14 = ssub.s32 %s9, 1
    %s15 = ssub.s32 %s9, 2
    %s16 = sadd.s32 %s9, 1
    %s17 = ssub.s32 %s9, %s16
    %p18 = scmp.eq.s32.totalorder %s17, 0
    %s20 = sadd.s32 %s19, 1
    %s21 = scalar_select %p18, %s19, %s20
    %p24 = pneg %p18
    %p25 = scmp.eq.s32.totalorder %s9, 1
    %p26 = por %p24, %p25
    %p27 = scmp.ne.s32.totalorder %s19, %s22
    %p28 = scmp.eq.s32.totalorder %s9, 0
    %p29 = por %p27, %p28
    %p30 = scmp.ne.s32.totalorder %s19, %s22
    %p31 = scmp.eq.s32.totalorder %s14, 1
    %p32 = por %p30, %p31
    %p33 = scmp.ne.s32.totalorder %s22, %s23
    %p34 = scmp.eq.s32.totalorder %s14, 0
    %p35 = por %p33, %p34
    %p36 = scmp.ne.s32.totalorder %s22, %s23
    %p37 = scmp.eq.s32.totalorder %s15, 1
    %p38 = por %p36, %p37
    %p40 = scmp.ne.s32.totalorder %s23, %s39
    %p41 = scmp.eq.s32.totalorder %s15, 0
    %p42 = por %p40, %p41
    %s44 = sadd.s32 %s43, 1
    %p47 = scmp.eq.s32.totalorder %s9, 1
    %p48 = scmp.ne.s32.totalorder %s43, %s45
    %p49 = scmp.eq.s32.totalorder %s9, 0
    %p50 = por %p48, %p49
    %p51 = scmp.ne.s32.totalorder %s43, %s45
    %p52 = scmp.eq.s32.totalorder %s14, 1
    %p53 = por %p51, %p52
    %p54 = scmp.ne.s32.totalorder %s45, %s46
    %p55 = scmp.eq.s32.totalorder %s14, 0
    %p56 = por %p54, %p55
    %p57 = scmp.ne.s32.totalorder %s45, %s46
    %p58 = scmp.eq.s32.totalorder %s15, 1
    %p59 = por %p57, %p58
    %p61 = scmp.ne.s32.totalorder %s46, %s60
    %p62 = scmp.eq.s32.totalorder %s15, 0
    %p63 = por %p61, %p62
    %s65 = sadd.s32 %s64, 1
    %p68 = scmp.eq.s32.totalorder %s9, 1
    %p69 = scmp.ne.s32.totalorder %s64, %s66
    %p70 = scmp.eq.s32.totalorder %s9, 0
    %p71 = por %p69, %p70
    %p72 = scmp.ne.s32.totalorder %s64, %s66
    %p73 = scmp.eq.s32.totalorder %s14, 1
    %p74 = por %p72, %p73
    %p75 = scmp.ne.s32.totalorder %s66, %s67
    %p76 = scmp.eq.s32.totalorder %s14, 0
    %p77 = por %p75, %p76
    %p78 = scmp.ne.s32.totalorder %s66, %s67
    %p79 = scmp.eq.s32.totalorder %s15, 1
    %p80 = por %p78, %p79
    %p82 = scmp.ne.s32.totalorder %s67, %s81
    %p83 = scmp.eq.s32.totalorder %s15, 0
    %p84 = por %p82, %p83
    %s85 = ssub.s32 %s9, %s16
    %p86 = scmp.eq.s32.totalorder %s85, 0
    %s88 = sadd.s32 %s87, 1
    %s89 = scalar_select %p86, %s87, %s88
    %p92 = pneg %p86
    %p93 = scmp.eq.s32.totalorder %s9, 1
    %p94 = por %p92, %p93
    %p95 = scmp.ne.s32.totalorder %s87, %s90
    %p96 = scmp.eq.s32.totalorder %s9, 0
    %p97 = por %p95, %p96
    %p98 = scmp.ne.s32.totalorder %s87, %s90
    %p99 = scmp.eq.s32.totalorder %s14, 1
    %p100 = por %p98, %p99
    %p101 = scmp.ne.s32.totalorder %s90, %s91
    %p102 = scmp.eq.s32.totalorder %s14, 0
    %p103 = por %p101, %p102
    %p104 = scmp.ne.s32.totalorder %s90, %s91
    %p105 = scmp.eq.s32.totalorder %s15, 1
    %p106 = por %p104, %p105
    %p108 = scmp.ne.s32.totalorder %s91, %s107
    %p109 = scmp.eq.s32.totalorder %s15, 0
    %p110 = por %p108, %p109
    %p111 = scmp.le.s32.totalorder 1, %s9
    %p112 = scmp.lt.s32.totalorder %s9, 3
    %p113 = pnand %p111, %p112
    %p114 = pneg %p113
    // Predicated region
    $region9: #{decoder_forward.1} parent=5 // pred_check
      _
    $region10: #{decoder_forward.1} parent=5 // pred_check_branch
      %116 = sbr.rel (%p113) target = $region12
    $region11: #{decoder_forward.1} parent=5 // pred_region
      %s117 = ssub.s32 %s9, 1
      // Predicated region
      $region13: #{decoder_forward.1} parent=11 // pred_check
        %p118 = pneg %p56
      $region14: #{decoder_forward.1} parent=11 // pred_check_branch
        %120 = sbr.rel (%p118) target = $region16
      $region15: #{decoder_forward.1} parent=11 // pred_region
        _
      $region16: #{decoder_forward.1} parent=11 // pred_fallthru
        _
      // Predicated region
      $region17: #{decoder_forward.1} parent=11 // pred_check
        %p121 = pneg %p77
      $region18: #{decoder_forward.1} parent=11 // pred_check_branch
        %123 = sbr.rel (%p121) target = $region20
      $region19: #{decoder_forward.1} parent=11 // pred_region
        _
      $region20: #{decoder_forward.1} parent=11 // pred_fallthru
        _
    $region12: #{decoder_forward.1} parent=5 // pred_fallthru
      _
    %p124 = scmp.lt.s32.totalorder %s9, 2
    // Predicated region
    $region21: #{decoder_forward.1} parent=5 // pred_check
      %p125 = pneg %p124
    $region22: #{decoder_forward.1} parent=5 // pred_check_branch
      %127 = sbr.rel (%p125) target = $region24
    $region23: #{decoder_forward.1} parent=5 // pred_region
      // Predicated region
      $region25: #{decoder_forward.1} parent=23 // pred_check
        %p128 = pneg %p29
      $region26: #{decoder_forward.1} parent=23 // pred_check_branch
        %130 = sbr.rel (%p128) target = $region28
      $region27: #{decoder_forward.1} parent=23 // pred_region
        %s131 = smul.u32 32, %s9
        %p132 = scmp.lt.s32.totalorder %s131, 63
        %s133 = scalar_select %p132, %s131, 63
        %s134 = smul.addr %s133, 4
        %s135 = scalar_lea.vmem %s0, %s134
        %s136 = smul.u32 32, %s9
      $region28: #{decoder_forward.1} parent=23 // pred_fallthru
        _
    $region24: #{decoder_forward.1} parent=5 // pred_fallthru
      _
    %p137 = scmp.le.s32.totalorder 1, %s9
    %p138 = scmp.lt.s32.totalorder %s9, 3
    %p139 = pnand %p137, %p138
    %p140 = pneg %p139
    // Predicated region
    $region29: #{decoder_forward.1} parent=5 // pred_check
      _
    $region30: #{decoder_forward.1} parent=5 // pred_check_branch
      %142 = sbr.rel (%p139) target = $region32
    $region31: #{decoder_forward.1} parent=5 // pred_region
      %s143 = ssub.s32 %s9, 1
      %s144 = smul.u32 32, %s14
      %p145 = scmp.lt.s32.totalorder %s144, 63
      %s146 = scalar_select %p145, %s144, 63
      %s147 = smul.addr %s146, 4
      %s148 = scalar_lea.vmem %s0, %s147
      %p149 = pneg %p35
      %p150 = pneg %p32
      %p151 = pneg %p56
      %p152 = pneg %p53
      %p153 = pneg %p77
      %p154 = pneg %p74
      %p155 = pneg %p103
      %p156 = pneg %p100
      %s157 = smul.u32 32, %s14
      %p158 = scmp.lt.s32.totalorder %s157, 63
      %s159 = scalar_select %p158, %s157, 63
      %s160 = smul.addr %s159, 8
      %s161 = scalar_lea.vmem %s3, %s160
      %s162 = smul.u32 32, %s14
      %p163 = scmp.lt.s32.totalorder %s162, 63
      %s164 = scalar_select %p163, %s162, 63
      %s165 = smul.addr %s164, 4
      %s166 = scalar_lea.vmem %s0, %s165
      %s167 = smul.u32 32, %s14
      %s168 = smul.u32 32, %s14
      %p169 = scmp.lt.s32.totalorder %s168, 63
      %s170 = scalar_select %p169, %s168, 63
      %s171 = smul.addr %s170, 8
      %s172 = scalar_lea.vmem %s3, %s171
      %s173 = smul.u32 32, %s14
      %v175 = vld [vmem:[%s166] sm:$0xf]
      %v176 = vld [vmem:[%s166 + $0x4] sm:$0xf]
      %v177 = vld [vmem:[%s166 + $0x8] sm:$0xf]
      %v178 = vld [vmem:[%s166 + $0xc] sm:$0xf]
      %v179 = vld [vmem:[%s166 + $0x10] sm:$0xf]
      %v180 = vld [vmem:[%s166 + $0x14] sm:$0xf]
      %v181 = vld [vmem:[%s166 + $0x18] sm:$0xf]
      %v182 = vld [vmem:[%s166 + $0x1c] sm:$0xf]
      %v183 = vld [vmem:[%s166 + $0x20] sm:$0xf]
      %v184 = vld [vmem:[%s166 + $0x24] sm:$0xf]
      %v185 = vld [vmem:[%s166 + $0x28] sm:$0xf]
      %v186 = vld [vmem:[%s166 + $0x2c] sm:$0xf]
      %v187 = vld [vmem:[%s166 + $0x30] sm:$0xf]
      %v188 = vld [vmem:[%s166 + $0x34] sm:$0xf]
      %v189 = vld [vmem:[%s166 + $0x38] sm:$0xf]
      %v190 = vld [vmem:[%s166 + $0x3c] sm:$0xf]
      %v191 = vld [vmem:[%s166 + $0x40] sm:$0xf]
      %v192 = vld [vmem:[%s166 + $0x44] sm:$0xf]
      %v193 = vld [vmem:[%s166 + $0x48] sm:$0xf]
      %v194 = vld [vmem:[%s166 + $0x4c] sm:$0xf]
      %v195 = vld [vmem:[%s166 + $0x50] sm:$0xf]
      %v196 = vld [vmem:[%s166 + $0x54] sm:$0xf]
      %v197 = vld [vmem:[%s166 + $0x58] sm:$0xf]
      %v198 = vld [vmem:[%s166 + $0x5c] sm:$0xf]
      %v199 = vld [vmem:[%s166 + $0x60] sm:$0xf]
      %v200 = vld [vmem:[%s166 + $0x64] sm:$0xf]
      %v201 = vld [vmem:[%s166 + $0x68] sm:$0xf]
      %v202 = vld [vmem:[%s166 + $0x6c] sm:$0xf]
      %v203 = vld [vmem:[%s166 + $0x70] sm:$0xf]
      %v204 = vld [vmem:[%s166 + $0x74] sm:$0xf]
      %v205 = vld [vmem:[%s166 + $0x78] sm:$0xf]
      %v206 = vld [vmem:[%s166 + $0x7c] sm:$0xf]
      %v207 = vld [vmem:[%s1] sm:$0xf]
      %v208 = vld [vmem:[%s1 + $0x4] sm:$0xf]
      %v209 = vld [vmem:[%s1 + $0x8] sm:$0xf]
      %v210 = vld [vmem:[%s1 + $0xc] sm:$0xf]
      %v211 = vld [vmem:[%s1 + $0x10] sm:$0xf]
      %v212 = vld [vmem:[%s1 + $0x14] sm:$0xf]
      %v213 = vld [vmem:[%s1 + $0x18] sm:$0xf]
      %v214 = vld [vmem:[%s1 + $0x1c] sm:$0xf]
      %v215 = vld [vmem:[%s1 + $0x20] sm:$0xf]
      %v216 = vld [vmem:[%s2] sm:$0x1]
      %v218 = vlaneseq
      %v219 = vshrl.u32 %v218, 7
      %v220 = vsub.s32 0, %v219
      %v221 = vrot.slane %v216, %v220
      %v255 = vunpack.c.l.b16 %v175
      %v256 = vunpack.c.l.b16 %v176
      %v257 = vunpack.c.l.b16 %v177
      %v258 = vunpack.c.l.b16 %v178
      %v259 = vunpack.c.l.b16 %v179
      %v260 = vunpack.c.l.b16 %v180
      %v261 = vunpack.c.l.b16 %v181
      %v262 = vunpack.c.l.b16 %v182
      %v263 = vunpack.c.l.b16 %v183
      %v264 = vunpack.c.l.b16 %v184
      %v265 = vunpack.c.l.b16 %v185
      %v266 = vunpack.c.l.b16 %v186
      %v267 = vunpack.c.l.b16 %v187
      %v268 = vunpack.c.l.b16 %v188
      %v269 = vunpack.c.l.b16 %v189
      %v270 = vunpack.c.l.b16 %v190
      %v271 = vunpack.c.l.b16 %v191
      %v272 = vunpack.c.l.b16 %v192
      %v273 = vunpack.c.l.b16 %v193
      %v274 = vunpack.c.l.b16 %v194
      %v275 = vunpack.c.l.b16 %v195
      %v276 = vunpack.c.l.b16 %v196
      %v277 = vunpack.c.l.b16 %v197
      %v278 = vunpack.c.l.b16 %v198
      %v279 = vunpack.c.l.b16 %v199
      %v280 = vunpack.c.l.b16 %v200
      %v281 = vunpack.c.l.b16 %v201
      %v282 = vunpack.c.l.b16 %v202
      %v283 = vunpack.c.l.b16 %v203
      %v284 = vunpack.c.l.b16 %v204
      %v285 = vunpack.c.l.b16 %v205
      %v286 = vunpack.c.l.b16 %v206
      %v287 = vpack.c.b16 %v256, %v255
      %v288 = vpack.c.b16 %v258, %v257
      %v289 = vpack.c.b16 %v260, %v259
      %v290 = vpack.c.b16 %v262, %v261
      %v291 = vpack.c.b16 %v264, %v263
      %v292 = vpack.c.b16 %v266, %v265
      %v293 = vpack.c.b16 %v268, %v267
      %v294 = vpack.c.b16 %v270, %v269
      %v295 = vpack.c.b16 %v272, %v271
      %v296 = vpack.c.b16 %v274, %v273
      %v297 = vpack.c.b16 %v276, %v275
      %v298 = vpack.c.b16 %v278, %v277
      %v299 = vpack.c.b16 %v280, %v279
      %v300 = vpack.c.b16 %v282, %v281
      %v301 = vpack.c.b16 %v284, %v283
      %v302 = vpack.c.b16 %v286, %v285
      %v312 = vunpack.c.l.b16 %v207
      %v313 = vunpack.c.l.b16 %v208
      %v314 = vunpack.c.l.b16 %v209
      %v315 = vunpack.c.l.b16 %v210
      %v316 = vunpack.c.l.b16 %v211
      %v317 = vunpack.c.l.b16 %v212
      %v318 = vunpack.c.l.b16 %v213
      %v319 = vunpack.c.l.b16 %v214
      %v320 = vunpack.c.l.b16 %v215
      %v321 = vpack.c.b16 %v313, %v312
      %v322 = vpack.c.b16 %v315, %v314
      %v323 = vpack.c.b16 %v317, %v316
      %v324 = vpack.c.b16 %v319, %v318
      %v325 = vpack.c.b16 %v320, %v320
      %vm330 = vcmask 588800
      %v332 = vsel %vm330, %v287, 0
      %v335 = vsel %vm330, %v288, 0
      %v338 = vsel %vm330, %v289, 0
      %v341 = vsel %vm330, %v290, 0
      %v344 = vsel %vm330, %v291, 0
      %v347 = vsel %vm330, %v292, 0
      %v350 = vsel %vm330, %v293, 0
      %v353 = vsel %vm330, %v294, 0
      %v356 = vsel %vm330, %v295, 0
      %v359 = vsel %vm330, %v296, 0
      %v362 = vsel %vm330, %v297, 0
      %v365 = vsel %vm330, %v298, 0
      %v368 = vsel %vm330, %v299, 0
      %v371 = vsel %vm330, %v300, 0
      %v374 = vsel %vm330, %v301, 0
      %v377 = vsel %vm330, %v302, 0
      %vm379 = vcmask 1043456
      %v381 = vsel %vm379, %v325, 0
      %383 = vmatprep.subr.bf16.mxu0 0
      %384 = vmatpush1.bf16.msra.mxu0 %v321
      %385 = vmatprep.subr.bf16.mxu0 0
      %386 = vmatpush1.bf16.msra.mxu0 %v322
      %387 = vmatprep.subr.bf16.mxu0 0
      %388 = vmatpush1.bf16.msra.mxu0 %v323
      %389 = vmatprep.subr.bf16.mxu0 0
      %390 = vmatpush1.bf16.msra.mxu0 %v324
      %391 = vmatprep.subr.bf16.mxu0 0
      %392 = vmatpush1.bf16.msra.mxu0 %v381
      %393 = vmatprep.subr.bf16.mxu0 0
      %394 = vmatpush1.bf16.msra.mxu0 0
      %395 = vmatprep.subr.bf16.mxu0 0
      %396 = vmatpush1.bf16.msra.mxu0 0
      %397 = vmatprep.subr.bf16.mxu0 0
      %398 = vmatpush1.bf16.msra.mxu0 0
      %399 = vmatprep.subr.bf16.mxu0 0
      %400 = vmatpush1.bf16.msra.mxu0 0
      %401 = vmatprep.subr.bf16.mxu0 0
      %402 = vmatpush1.bf16.msra.mxu0 0
      %403 = vmatprep.subr.bf16.mxu0 0
      %404 = vmatpush1.bf16.msra.mxu0 0
      %405 = vmatprep.subr.bf16.mxu0 0
      %406 = vmatpush1.bf16.msra.mxu0 0
      %407 = vmatprep.subr.bf16.mxu0 0
      %408 = vmatpush1.bf16.msra.mxu0 0
      %409 = vmatprep.subr.bf16.mxu0 0
      %410 = vmatpush1.bf16.msra.mxu0 0
      %411 = vmatprep.subr.bf16.mxu0 0
      %412 = vmatpush1.bf16.msra.mxu0 0
      %413 = vmatprep.subr.bf16.mxu0 0
      %414 = vmatpush1.bf16.msra.mxu0 0
      %415 = vmatprep.mubr.bf16.mxu0 0
      %416 = vmatmul.mubr.bf16.gmra.mrb[0].mxu0 %v332
      %v417 = vpop.f32.mrb[0].mxu0
      %v418 = vadd.f32 %v221, %v417
      %v419 = vpop.f32.mrb[0].mxu0
      %v420 = vpop.f32.mrb[0].mxu0
      %v421 = vadd.f32 %v221, %v420
      %v422 = vpop.f32.mrb[0].mxu0
      %423 = vmatprep.mubr.bf16.mxu0 0
      %424 = vmatmul.mubr.bf16.gmra.mrb[0].mxu0 %v335
      %v425 = vpop.f32.mrb[0].mxu0
      %v426 = vadd.f32 %v221, %v425
      %v427 = vpop.f32.mrb[0].mxu0
      %v428 = vpop.f32.mrb[0].mxu0
      %v429 = vadd.f32 %v221, %v428
      %v430 = vpop.f32.mrb[0].mxu0
      %431 = vmatprep.mubr.bf16.mxu0 0
      %432 = vmatmul.mubr.bf16.gmra.mrb[0].mxu0 %v338
      %v433 = vpop.f32.mrb[0].mxu0
      %v434 = vadd.f32 %v221, %v433
      %v435 = vpop.f32.mrb[0].mxu0
      %v436 = vpop.f32.mrb[0].mxu0
      %v437 = vadd.f32 %v221, %v436
      %v438 = vpop.f32.mrb[0].mxu0
      %439 = vmatprep.mubr.bf16.mxu0 0
      %440 = vmatmul.mubr.bf16.gmra.mrb[0].mxu0 %v341
      %v441 = vpop.f32.mrb[0].mxu0
      %v442 = vadd.f32 %v221, %v441
      %v443 = vpop.f32.mrb[0].mxu0
      %v444 = vpop.f32.mrb[0].mxu0
      %v445 = vadd.f32 %v221, %v444
      %v446 = vpop.f32.mrb[0].mxu0
      %447 = vmatprep.mubr.bf16.mxu0 0
      %448 = vmatmul.mubr.bf16.gmra.mrb[0].mxu0 %v344
      %v449 = vpop.f32.mrb[0].mxu0
      %v450 = vadd.f32 %v221, %v449
      %v451 = vpop.f32.mrb[0].mxu0
      %v452 = vpop.f32.mrb[0].mxu0
      %v453 = vadd.f32 %v221, %v452
      %v454 = vpop.f32.mrb[0].mxu0
      %455 = vmatprep.mubr.bf16.mxu0 0
      %456 = vmatmul.mubr.bf16.gmra.mrb[0].mxu0 %v347
      %v457 = vpop.f32.mrb[0].mxu0
      %v458 = vadd.f32 %v221, %v457
      %v459 = vpop.f32.mrb[0].mxu0
      %v460 = vpop.f32.mrb[0].mxu0
      %v461 = vadd.f32 %v221, %v460
      %v462 = vpop.f32.mrb[0].mxu0
      %463 = vmatprep.mubr.bf16.mxu0 0
      %464 = vmatmul.mubr.bf16.gmra.mrb[0].mxu0 %v350
      %v465 = vpop.f32.mrb[0].mxu0
      %v466 = vadd.f32 %v221, %v465
      %v467 = vpop.f32.mrb[0].mxu0
      %v468 = vpop.f32.mrb[0].mxu0
      %v469 = vadd.f32 %v221, %v468
      %v470 = vpop.f32.mrb[0].mxu0
      %471 = vmatprep.mubr.bf16.mxu0 0
      %472 = vmatmul.mubr.bf16.gmra.mrb[0].mxu0 %v353
      %v473 = vpop.f32.mrb[0].mxu0
      %v474 = vadd.f32 %v221, %v473
      %v475 = vpop.f32.mrb[0].mxu0
      %v476 = vpop.f32.mrb[0].mxu0
      %v477 = vadd.f32 %v221, %v476
      %v478 = vpop.f32.mrb[0].mxu0
      %479 = vmatprep.mubr.bf16.mxu0 0
      %480 = vmatmul.mubr.bf16.gmra.mrb[0].mxu0 %v356
      %v481 = vpop.f32.mrb[0].mxu0
      %v482 = vadd.f32 %v221, %v481
      %v483 = vpop.f32.mrb[0].mxu0
      %v484 = vpop.f32.mrb[0].mxu0
      %v485 = vadd.f32 %v221, %v484
      %v486 = vpop.f32.mrb[0].mxu0
      %487 = vmatprep.mubr.bf16.mxu0 0
      %488 = vmatmul.mubr.bf16.gmra.mrb[0].mxu0 %v359
      %v489 = vpop.f32.mrb[0].mxu0
      %v490 = vadd.f32 %v221, %v489
      %v491 = vpop.f32.mrb[0].mxu0
      %v492 = vpop.f32.mrb[0].mxu0
      %v493 = vadd.f32 %v221, %v492
      %v494 = vpop.f32.mrb[0].mxu0
      %495 = vmatprep.mubr.bf16.mxu0 0
      %496 = vmatmul.mubr.bf16.gmra.mrb[0].mxu0 %v362
      %v497 = vpop.f32.mrb[0].mxu0
      %v498 = vadd.f32 %v221, %v497
      %v499 = vpop.f32.mrb[0].mxu0
      %v500 = vpop.f32.mrb[0].mxu0
      %v501 = vadd.f32 %v221, %v500
      %v502 = vpop.f32.mrb[0].mxu0
      %503 = vmatprep.mubr.bf16.mxu0 0
      %504 = vmatmul.mubr.bf16.gmra.mrb[0].mxu0 %v365
      %v505 = vpop.f32.mrb[0].mxu0
      %v506 = vadd.f32 %v221, %v505
      %v507 = vpop.f32.mrb[0].mxu0
      %v508 = vpop.f32.mrb[0].mxu0
      %v509 = vadd.f32 %v221, %v508
      %v510 = vpop.f32.mrb[0].mxu0
      %511 = vmatprep.mubr.bf16.mxu0 0
      %512 = vmatmul.mubr.bf16.gmra.mrb[0].mxu0 %v368
      %v513 = vpop.f32.mrb[0].mxu0
      %v514 = vadd.f32 %v221, %v513
      %v515 = vpop.f32.mrb[0].mxu0
      %v516 = vpop.f32.mrb[0].mxu0
      %v517 = vadd.f32 %v221, %v516
      %v518 = vpop.f32.mrb[0].mxu0
      %519 = vmatprep.mubr.bf16.mxu0 0
      %520 = vmatmul.mubr.bf16.gmra.mrb[0].mxu0 %v371
      %v521 = vpop.f32.mrb[0].mxu0
      %v522 = vadd.f32 %v221, %v521
      %v523 = vpop.f32.mrb[0].mxu0
      %v524 = vpop.f32.mrb[0].mxu0
      %v525 = vadd.f32 %v221, %v524
      %v526 = vpop.f32.mrb[0].mxu0
      %527 = vmatprep.mubr.bf16.mxu0 0
      %528 = vmatmul.mubr.bf16.gmra.mrb[0].mxu0 %v374
      %v529 = vpop.f32.mrb[0].mxu0
      %v530 = vadd.f32 %v221, %v529
      %v531 = vpop.f32.mrb[0].mxu0
      %v532 = vpop.f32.mrb[0].mxu0
      %v533 = vadd.f32 %v221, %v532
      %v534 = vpop.f32.mrb[0].mxu0
      %535 = vmatprep.mubr.bf16.mxu0 0
      %536 = vmatmul.mubr.bf16.gmra.mrb[0].mxu0 %v377
      %v537 = vpop.f32.mrb[0].mxu0
      %v538 = vadd.f32 %v221, %v537
      %v539 = vpop.f32.mrb[0].mxu0
      %v540 = vpop.f32.mrb[0].mxu0
      %v541 = vadd.f32 %v221, %v540
      %v542 = vpop.f32.mrb[0].mxu0
      %543 = vdwg.mxu0
      %v544 = vmax.f32 %v418, 0.0
      %v545 = vmax.f32 %v421, 0.0
      %v546 = vmax.f32 %v426, 0.0
      %v547 = vmax.f32 %v429, 0.0
      %v548 = vmax.f32 %v434, 0.0
      %v549 = vmax.f32 %v437, 0.0
      %v550 = vmax.f32 %v442, 0.0
      %v551 = vmax.f32 %v445, 0.0
      %v552 = vmax.f32 %v450, 0.0
      %v553 = vmax.f32 %v453, 0.0
      %v554 = vmax.f32 %v458, 0.0
      %v555 = vmax.f32 %v461, 0.0
      %v556 = vmax.f32 %v466, 0.0
      %v557 = vmax.f32 %v469, 0.0
      %v558 = vmax.f32 %v474, 0.0
      %v559 = vmax.f32 %v477, 0.0
      %v560 = vmax.f32 %v482, 0.0
      %v561 = vmax.f32 %v485, 0.0
      %v562 = vmax.f32 %v490, 0.0
      %v563 = vmax.f32 %v493, 0.0
      %v564 = vmax.f32 %v498, 0.0
      %v565 = vmax.f32 %v501, 0.0
      %v566 = vmax.f32 %v506, 0.0
      %v567 = vmax.f32 %v509, 0.0
      %v568 = vmax.f32 %v514, 0.0
      %v569 = vmax.f32 %v517, 0.0
      %v570 = vmax.f32 %v522, 0.0
      %v571 = vmax.f32 %v525, 0.0
      %v572 = vmax.f32 %v530, 0.0
      %v573 = vmax.f32 %v533, 0.0
      %v574 = vmax.f32 %v538, 0.0
      %v575 = vmax.f32 %v541, 0.0
      %576 = vst [vmem:[%s172] sm:$0xff] %v544
      %577 = vst [vmem:[%s172 + $0x8] sm:$0xff] %v545
      %578 = vst [vmem:[%s172 + $0x10] sm:$0xff] %v546
      %579 = vst [vmem:[%s172 + $0x18] sm:$0xff] %v547
      %580 = vst [vmem:[%s172 + $0x20] sm:$0xff] %v548
      %581 = vst [vmem:[%s172 + $0x28] sm:$0xff] %v549
      %582 = vst [vmem:[%s172 + $0x30] sm:$0xff] %v550
      %583 = vst [vmem:[%s172 + $0x38] sm:$0xff] %v551
      %584 = vst [vmem:[%s172 + $0x40] sm:$0xff] %v552
      %585 = vst [vmem:[%s172 + $0x48] sm:$0xff] %v553
      %586 = vst [vmem:[%s172 + $0x50] sm:$0xff] %v554
      %587 = vst [vmem:[%s172 + $0x58] sm:$0xff] %v555
      %588 = vst [vmem:[%s172 + $0x60] sm:$0xff] %v556
      %589 = vst [vmem:[%s172 + $0x68] sm:$0xff] %v557
      %590 = vst [vmem:[%s172 + $0x70] sm:$0xff] %v558
      %591 = vst [vmem:[%s172 + $0x78] sm:$0xff] %v559
      %592 = vst [vmem:[%s172 + $0x80] sm:$0xff] %v560
      %593 = vst [vmem:[%s172 + $0x88] sm:$0xff] %v561
      %594 = vst [vmem:[%s172 + $0x90] sm:$0xff] %v562
      %595 = vst [vmem:[%s172 + $0x98] sm:$0xff] %v563
      %596 = vst [vmem:[%s172 + $0xa0] sm:$0xff] %v564
      %597 = vst [vmem:[%s172 + $0xa8] sm:$0xff] %v565
      %598 = vst [vmem:[%s172 + $0xb0] sm:$0xff] %v566
      %599 = vst [vmem:[%s172 + $0xb8] sm:$0xff] %v567
      %600 = vst [vmem:[%s172 + $0xc0] sm:$0xff] %v568
      %601 = vst [vmem:[%s172 + $0xc8] sm:$0xff] %v569
      %602 = vst [vmem:[%s172 + $0xd0] sm:$0xff] %v570
      %603 = vst [vmem:[%s172 + $0xd8] sm:$0xff] %v571
      %604 = vst [vmem:[%s172 + $0xe0] sm:$0xff] %v572
      %605 = vst [vmem:[%s172 + $0xe8] sm:$0xff] %v573
      %606 = vst [vmem:[%s172 + $0xf0] sm:$0xff] %v574
      %607 = vst [vmem:[%s172 + $0xf8] sm:$0xff] %v575
      %s608 = smul.u32 32, %s14
      %p609 = scmp.lt.s32.totalorder %s608, 63
      %s610 = scalar_select %p609, %s608, 63
      %s611 = smul.addr %s610, 8
      %s612 = scalar_lea.vmem %s3, %s611
      // Predicated region
      $region33: #{decoder_forward.1} parent=31 // pred_check
        %p613 = pneg %p100
      $region34: #{decoder_forward.1} parent=31 // pred_check_branch
        %615 = sbr.rel (%p613) target = $region36
      $region35: #{decoder_forward.1} parent=31 // pred_region
        %s616 = smul.u32 32, %s14
      $region36: #{decoder_forward.1} parent=31 // pred_fallthru
        _
    $region32: #{decoder_forward.1} parent=5 // pred_fallthru
      _
    %p617 = scmp.le.s32.totalorder 2, %s9
    // Predicated region
    $region37: #{decoder_forward.1} parent=5 // pred_check
      %p618 = pneg %p617
    $region38: #{decoder_forward.1} parent=5 // pred_check_branch
      %620 = sbr.rel (%p618) target = $region40
    $region39: #{decoder_forward.1} parent=5 // pred_region
      %s621 = ssub.s32 %s9, 2
      // Predicated region
      $region41: #{decoder_forward.1} parent=39 // pred_check
        %p622 = pneg %p106
      $region42: #{decoder_forward.1} parent=39 // pred_check_branch
        %624 = sbr.rel (%p622) target = $region44
      $region43: #{decoder_forward.1} parent=39 // pred_region
        %s625 = smul.u32 32, %s15
        %p626 = scmp.lt.s32.totalorder %s625, 63
        %s627 = scalar_select %p626, %s625, 63
        %s628 = smul.addr %s627, 8
        %s629 = scalar_lea.vmem %s3, %s628
      $region44: #{decoder_forward.1} parent=39 // pred_fallthru
        _
    $region40: #{decoder_forward.1} parent=5 // pred_fallthru
      _
  $region6: #{decoder_forward.1} parent=0 // loop_footer
    %s13 = sadd.s32 1, %s9
  $region7: #{decoder_forward.1} parent=0 // loop_footer_branch
    %8 = sbr.rel target = $region3
  $region8: #{decoder_forward.1} parent=0 // loop_exit
    _

</llo_original>
